<compile_context>
chip_gen: v7x
topology: tpu7x:2x2x1
jax: 0.10.0
libtpu: 0.0.40
codegen_flags: <defaults>
</compile_context>

<pallas_src>
import functools

import jax
import jax.numpy as jnp
from jax.experimental import pallas as pl
from jax.experimental.pallas import tpu as pltpu

_LANES = 128


def _round_up(n, m):
    return ((n + m - 1) // m) * m


def basic_block_kernel(drop_threshold, inv_keep, eps, use_bf16_matmul,
                       x_ref, w_ref, b_ref, gamma_ref, beta_ref, bits_ref,
                       o_ref):
    # ---- Linear: y = x @ W^T + b   (W^T pre-transposed & lane-padded) ----
    if use_bf16_matmul:
        xm = x_ref[...].astype(jnp.bfloat16)
        wm = w_ref[...].astype(jnp.bfloat16)
    else:
        xm = x_ref[...]
        wm = w_ref[...]
    h = jnp.dot(xm, wm, preferred_element_type=jnp.float32)
    h = h + b_ref[...]                       # (B, Up) + (1, Up)

    # ---- ReLU ----
    h = jnp.maximum(h, 0.0)

    # ---- Dropout (training): keep with prob 1-p, scale kept by 1/(1-p) ----
    # Single unsigned compare against p * 2^32 (bits are uniform uint32).
    keep = bits_ref[...] >= jnp.uint32(drop_threshold)
    h = jnp.where(keep, h * inv_keep, 0.0)

    # ---- BatchNorm1d (training: biased batch statistics), fused affine ----
    mean = jnp.mean(h, axis=0, keepdims=True)          # (1, Up)
    d = h - mean                                       # formed exactly once
    var = jnp.mean(d * d, axis=0, keepdims=True)       # (1, Up)
    scale = gamma_ref[...] * jax.lax.rsqrt(var + eps)  # EUP rsqrt
    o_ref[...] = (d * scale + beta_ref[...]).astype(o_ref.dtype)


def basic_block(x, w, b, gamma, beta, key, *, dropout_p=0.25, eps=1e-5,
                use_bf16_matmul=True):
    """Training-mode BasicBlock forward.

    x: (B, F) float32
    w: (U, F)  -- PyTorch nn.Linear weight layout
    b, gamma, beta: (U,)
    key: jax PRNG key for the dropout mask (fresh key per call/step).
    """
    B, F = x.shape
    U = w.shape[0]
    Up = _round_up(U, _LANES)  # lane-dense padded feature width

    # Pad the output/feature dimension to a multiple of 128 lanes.
    # Padded columns stay exactly zero through the whole chain.
    w_t = jnp.zeros((F, Up), jnp.float32).at[:, :U].set(w.T.astype(jnp.float32))
    b_p = jnp.zeros((1, Up), jnp.float32).at[:, :U].set(b.astype(jnp.float32))
    g_p = jnp.zeros((1, Up), jnp.float32).at[:, :U].set(gamma.astype(jnp.float32))
    be_p = jnp.zeros((1, Up), jnp.float32).at[:, :U].set(beta.astype(jnp.float32))

    # Dropout randomness generated portably in the wrapper (no in-kernel PRNG).
    bits = jax.random.bits(key, (B, Up), dtype=jnp.uint32)

    p = float(dropout_p)
    drop_threshold = min(int(round(p * 2.0 ** 32)), 2 ** 32 - 1)
    inv_keep = (1.0 / (1.0 - p)) if p < 1.0 else 0.0

    kernel = functools.partial(basic_block_kernel, drop_threshold, inv_keep,
                               float(eps), bool(use_bf16_matmul))

    # Explicit VMEM budget (inputs + output + f32 intermediates, with
    # headroom), capped at 64 MiB so the same setting is valid on v7x.
    vmem_bytes = 4 * (x.size + w_t.size + 3 * Up + bits.size + 4 * B * Up)
    vmem_bytes = min(max(2 * vmem_bytes + (1 << 20), 4 << 20), 64 << 20)

    # Whole batch in a single invocation: BN statistics must be computed over
    # the full batch (tiling the batch over a grid would silently make them
    # per-tile), and one big block amortizes the ~0.35us/step overhead.
    out_p = pl.pallas_call(
        kernel,
        out_shape=jax.ShapeDtypeStruct((B, Up), jnp.float32),
        in_specs=[
            pl.BlockSpec(memory_space=pltpu.MemorySpace.VMEM),  # x
            pl.BlockSpec(memory_space=pltpu.MemorySpace.VMEM),  # w_t (padded)
            pl.BlockSpec(memory_space=pltpu.MemorySpace.VMEM),  # b
            pl.BlockSpec(memory_space=pltpu.MemorySpace.VMEM),  # gamma
            pl.BlockSpec(memory_space=pltpu.MemorySpace.VMEM),  # beta
            pl.BlockSpec(memory_space=pltpu.MemorySpace.VMEM),  # dropout bits
        ],
        out_specs=pl.BlockSpec(memory_space=pltpu.MemorySpace.VMEM),
        compiler_params=pltpu.CompilerParams(vmem_limit_bytes=vmem_bytes),
    )(x.astype(jnp.float32), w_t, b_p, g_p, be_p, bits)

    # TODO(synk): BatchNorm1d running_mean/running_var buffers are not
    # updated (training-mode forward output does not depend on them).
    return out_p[:, :U]


if __name__ == "__main__":
    # Small shapes consistent with the module: batch=8, in_features=32, units=64.
    B, F, U = 8, 32, 64
    key = jax.random.PRNGKey(0)
    kx, kw, kb, kg, kbeta, kdrop = jax.random.split(key, 6)

    x = jax.random.normal(kx, (B, F), dtype=jnp.float32)
    # nn.Linear weight layout is (units, in_features).
    w = jax.random.normal(kw, (U, F), dtype=jnp.float32) * (1.0 / jnp.sqrt(F))
    b = jax.random.normal(kb, (U,), dtype=jnp.float32) * 0.01
    gamma = 1.0 + 0.1 * jax.random.normal(kg, (U,), dtype=jnp.float32)
    beta = 0.1 * jax.random.normal(kbeta, (U,), dtype=jnp.float32)

    out = basic_block(x, w, b, gamma, beta, kdrop, dropout_p=0.25, eps=1e-5)
    jax.block_until_ready(out)

    assert out.shape == (B, U) and out.dtype == jnp.float32
    assert bool(jnp.all(jnp.isfinite(out)))
    print("KERNEL_OK")
</pallas_src>

<mosaic_0001>
module attributes {stable_mosaic.version = 11 : i64} {
  func.func @basic_block_kernel(%arg0: memref<8x32xf32, #tpu.memory_space<vmem>>, %arg1: memref<32x128xf32, #tpu.memory_space<vmem>>, %arg2: memref<1x128xf32, #tpu.memory_space<vmem>>, %arg3: memref<1x128xf32, #tpu.memory_space<vmem>>, %arg4: memref<1x128xf32, #tpu.memory_space<vmem>>, %arg5: memref<8x128xi32, #tpu.memory_space<vmem>>, %arg6: memref<8x128xf32, #tpu.memory_space<vmem>>) attributes {dimension_semantics = [], scalar_prefetch = 0 : i64, scratch_operands = 0 : i64, tpu.core_type = #tpu.core_type<tc>} {
    %c0 = arith.constant 0 : index
    %c0_0 = arith.constant 0 : index
    %0 = vector.load %arg0[%c0, %c0_0] : memref<8x32xf32, #tpu.memory_space<vmem>>, vector<8x32xf32>
    %1 = arith.truncf %0 : vector<8x32xf32> to vector<8x32xbf16>
    %c0_1 = arith.constant 0 : index
    %c0_2 = arith.constant 0 : index
    %2 = vector.load %arg1[%c0_1, %c0_2] : memref<32x128xf32, #tpu.memory_space<vmem>>, vector<32x128xf32>
    %3 = arith.truncf %2 : vector<32x128xf32> to vector<32x128xbf16>
    %cst = arith.constant dense<0.000000e+00> : vector<8x128xf32>
    %4 = tpu.matmul %1, %3, %cst {dimension_numbers = #tpu.dot_dimension_numbers<[1], [0], [0], [1], [0, 0, 1, 1], [], []>} : vector<8x32xbf16>, vector<32x128xbf16>, vector<8x128xf32> -> vector<8x128xf32>
    %c0_3 = arith.constant 0 : index
    %c0_4 = arith.constant 0 : index
    %5 = vector.load %arg2[%c0_3, %c0_4] : memref<1x128xf32, #tpu.memory_space<vmem>>, vector<1x128xf32>
    %6 = vector.broadcast %5 : vector<1x128xf32> to vector<8x128xf32>
    %7 = arith.addf %4, %6 : vector<8x128xf32>
    %cst_5 = arith.constant 0.000000e+00 : f32
    %8 = vector.broadcast %cst_5 : f32 to vector<8x128xf32>
    %9 = arith.maximumf %7, %8 : vector<8x128xf32>
    %c0_6 = arith.constant 0 : index
    %c0_7 = arith.constant 0 : index
    %10 = vector.load %arg5[%c0_6, %c0_7] : memref<8x128xi32, #tpu.memory_space<vmem>>, vector<8x128xi32>
    %c1073741824_i32 = arith.constant 1073741824 : i32
    %11 = vector.broadcast %c1073741824_i32 : i32 to vector<8x128xi32>
    %12 = arith.cmpi uge, %10, %11 : vector<8x128xi32>
    %cst_8 = arith.constant 1.33333337 : f32
    %13 = vector.broadcast %cst_8 : f32 to vector<8x128xf32>
    %14 = arith.mulf %9, %13 : vector<8x128xf32>
    %cst_9 = arith.constant 0.000000e+00 : f32
    %15 = vector.broadcast %cst_9 : f32 to vector<8x128xf32>
    %16 = arith.select %12, %14, %15 : vector<8x128xi1>, vector<8x128xf32>
    %cst_10 = arith.constant dense<0.000000e+00> : vector<128xf32>
    %17 = vector.multi_reduction <add>, %16, %cst_10 [0] : vector<8x128xf32> to vector<128xf32>
    %18 = vector.shape_cast %17 : vector<128xf32> to vector<1x128xf32>
    %cst_11 = arith.constant 8.000000e+00 : f32
    %19 = vector.broadcast %cst_11 : f32 to vector<1x128xf32>
    %20 = arith.divf %18, %19 : vector<1x128xf32>
    %21 = vector.broadcast %20 : vector<1x128xf32> to vector<8x128xf32>
    %22 = arith.subf %16, %21 : vector<8x128xf32>
    %23 = arith.mulf %22, %22 : vector<8x128xf32>
    %cst_12 = arith.constant dense<0.000000e+00> : vector<128xf32>
    %24 = vector.multi_reduction <add>, %23, %cst_12 [0] : vector<8x128xf32> to vector<128xf32>
    %25 = vector.shape_cast %24 : vector<128xf32> to vector<1x128xf32>
    %cst_13 = arith.constant 8.000000e+00 : f32
    %26 = vector.broadcast %cst_13 : f32 to vector<1x128xf32>
    %27 = arith.divf %25, %26 : vector<1x128xf32>
    %c0_14 = arith.constant 0 : index
    %c0_15 = arith.constant 0 : index
    %28 = vector.load %arg3[%c0_14, %c0_15] : memref<1x128xf32, #tpu.memory_space<vmem>>, vector<1x128xf32>
    %cst_16 = arith.constant 9.99999974E-6 : f32
    %29 = vector.broadcast %cst_16 : f32 to vector<1x128xf32>
    %30 = arith.addf %27, %29 : vector<1x128xf32>
    %31 = math.rsqrt %30 : vector<1x128xf32>
    %32 = arith.mulf %28, %31 : vector<1x128xf32>
    %33 = vector.broadcast %32 : vector<1x128xf32> to vector<8x128xf32>
    %34 = arith.mulf %22, %33 : vector<8x128xf32>
    %c0_17 = arith.constant 0 : index
    %c0_18 = arith.constant 0 : index
    %35 = vector.load %arg4[%c0_17, %c0_18] : memref<1x128xf32, #tpu.memory_space<vmem>>, vector<1x128xf32>
    %36 = vector.broadcast %35 : vector<1x128xf32> to vector<8x128xf32>
    %37 = arith.addf %34, %36 : vector<8x128xf32>
    %c0_19 = arith.constant 0 : index
    %c0_20 = arith.constant 0 : index
    %38 = vector.load %arg6[%c0_19, %c0_20] : memref<8x128xf32, #tpu.memory_space<vmem>>, vector<8x128xf32>
    tpu.vector_store %arg6[%c0_19, %c0_20], %37 {strides = array<i32>} : memref<8x128xf32, #tpu.memory_space<vmem>>, vector<8x128xf32>,
    return
  }
}

</mosaic_0001>

<llo_original>
// kernel: tpu_custom_call.1
$region0: #{tpu_custom_call.1}
  #allocation0 [shape = 'u32[]', space=smem, size = 0x4, offset = 0x4, fixed_abs, tag = 'smem constant byte address 0x4 - core index']
  #allocation1 [shape = 'u32[144,128]{1,0:T(1,128)}', space=vmem, size = 0x12000, scoped, tag = 'internal scratch']
  %s0 = inlined_call_operand.hbm [shape: f32[8,32], index: 0, kind: input, shape index: {}]
  %s1 = inlined_call_operand.hbm [shape: f32[32,128], index: 1, kind: input, shape index: {}]
  %s2 = inlined_call_operand.vmem [shape: f32[1,128], index: 2, kind: input, shape index: {}]
  %s3 = inlined_call_operand.vmem [shape: f32[1,128], index: 3, kind: input, shape index: {}]
  %s4 = inlined_call_operand.vmem [shape: f32[1,128], index: 4, kind: input, shape index: {}]
  %s5 = inlined_call_operand.vmem [shape: u32[8,128], index: 5, kind: input, shape index: {}]
  %s6 = inlined_call_operand.hbm [shape: f32[8,128], index: 6, kind: output, shape index: {}]
  %s7 = sld [smem:[#allocation0]]
  $region42: #{tpu_custom_call.1} parent=0
    _
  %s9 = ssub.s32 1, %s7
  %s10 = scalar_select 0, %s9, %s7
  $region1: #{tpu_custom_call.1} parent=0
    #allocation2 [shape = 'u8[4096]{0}', space=vmem, size = 0x1000, scoped, tag = 'input window, operand 0, single buffered']
    #allocation3 [shape = 's32[1]{0}', space=sflag, size = 0x4, scoped, tag = 'scoped memory for tpu_custom_call.1']
    #allocation4 [shape = 's32[1]{0}', space=sflag, size = 0x4, scoped, tag = 'scoped memory for tpu_custom_call.1']
    #allocation5 [shape = 'u8[16384]{0}', space=vmem, size = 0x4000, scoped, tag = 'input window, operand 1, single buffered']
    #allocation6 [shape = 's32[1]{0}', space=sflag, size = 0x4, scoped, tag = 'scoped memory for tpu_custom_call.1']
    #allocation7 [shape = 'u8[4096]{0}', space=vmem, size = 0x1000, scoped, tag = 'output window, operand 0, single buffered']
    %11 = vsyncpa [#allocation3], 0
    %12 = vsyncpa [#allocation6], 0
    %13 = vsyncpa [#allocation4], 0
    // Predicated region
    $region2: #{tpu_custom_call.1} parent=1 // pred_check
      _
    $region3: #{tpu_custom_call.1} parent=1 // pred_check_branch
      %15 = sbr.rel (0) target = $region5
    $region4: #{tpu_custom_call.1} parent=1 // pred_region
      %s17 = ssub.s32 128, 128
      %18 = vsyncadd [#allocation3], %s17
      %s20 = sshll.u32 [#allocation2], 4
      %s21 = int_to_ptr.vmem [resolvable:$true] %s20
      %23 = dma.hbm_to_vmem [thread:$0]  %s0, 128, %s21, [#allocation3]
    $region5: #{tpu_custom_call.1} parent=1 // pred_fallthru
      _
    // Predicated region
    $region6: #{tpu_custom_call.1} parent=1 // pred_check
      _
    $region7: #{tpu_custom_call.1} parent=1 // pred_check_branch
      %25 = sbr.rel (0) target = $region9
    $region8: #{tpu_custom_call.1} parent=1 // pred_region
      %s27 = ssub.s32 512, 512
      %28 = vsyncadd [#allocation6], %s27
      %s29 = sshll.u32 [#allocation5], 4
      %s30 = int_to_ptr.vmem [resolvable:$true] %s29
      %35 = dma.hbm_to_vmem [thread:$0]  %s1, 512, %s30, [#allocation6], 128, 128, 8
    $region9: #{tpu_custom_call.1} parent=1 // pred_fallthru
      _
    // Predicated region
    $region10: #{tpu_custom_call.1} parent=1 // pred_check
      _
    $region11: #{tpu_custom_call.1} parent=1 // pred_check_branch
      %37 = sbr.rel (0) target = $region13
    $region12: #{tpu_custom_call.1} parent=1 // pred_region
      _
    $region13: #{tpu_custom_call.1} parent=1 // pred_fallthru
      _
    // Predicated region
    $region14: #{tpu_custom_call.1} parent=1 // pred_check
      _
    $region15: #{tpu_custom_call.1} parent=1 // pred_check_branch
      %39 = sbr.rel (0) target = $region17
    $region16: #{tpu_custom_call.1} parent=1 // pred_region
      _
    $region17: #{tpu_custom_call.1} parent=1 // pred_fallthru
      _
    // Predicated region
    $region18: #{tpu_custom_call.1} parent=1 // pred_check
      _
    $region19: #{tpu_custom_call.1} parent=1 // pred_check_branch
      %41 = sbr.rel (0) target = $region21
    $region20: #{tpu_custom_call.1} parent=1 // pred_region
      _
    $region21: #{tpu_custom_call.1} parent=1 // pred_fallthru
      _
    // Predicated region
    $region22: #{tpu_custom_call.1} parent=1 // pred_check
      _
    $region23: #{tpu_custom_call.1} parent=1 // pred_check_branch
      %43 = sbr.rel (0) target = $region25
    $region24: #{tpu_custom_call.1} parent=1 // pred_region
      _
    $region25: #{tpu_custom_call.1} parent=1 // pred_fallthru
      _
    // Predicated region
    $region26: #{tpu_custom_call.1} parent=1 // pred_check
      _
    $region27: #{tpu_custom_call.1} parent=1 // pred_check_branch
      %45 = sbr.rel (0) target = $region29
    $region28: #{tpu_custom_call.1} parent=1 // pred_region
      %46 = dma.done [#allocation3], 128
    $region29: #{tpu_custom_call.1} parent=1 // pred_fallthru
      _
    // Predicated region
    $region30: #{tpu_custom_call.1} parent=1 // pred_check
      _
    $region31: #{tpu_custom_call.1} parent=1 // pred_check_branch
      %48 = sbr.rel (0) target = $region33
    $region32: #{tpu_custom_call.1} parent=1 // pred_region
      %49 = dma.done [#allocation6], 512
    $region33: #{tpu_custom_call.1} parent=1 // pred_fallthru
      _
    %v51 = vld [vmem:[#allocation2] sm:$0xff]
    %v52 = vpack.c.bf16 %v51, %v51
    %v53 = vld [vmem:[#allocation5] sm:$0xff]
    %v54 = vld [vmem:[#allocation5 + $0x8] sm:$0xff]
    %v55 = vld [vmem:[#allocation5 + $0x10] sm:$0xff]
    %v56 = vld [vmem:[#allocation5 + $0x18] sm:$0xff]
    %v57 = vpack.c.bf16 %v54, %v53
    %v58 = vpack.c.bf16 %v56, %v55
    %v59 = vld [vmem:[%s2] sm:$0x1]
    %v61 = vlaneseq
    %v62 = vshrl.u32 %v61, 7
    %v63 = vsub.s32 0, %v62
    %v64 = vrot.slane %v59, %v63
    %vm66 = vcmask 261120
    %v68 = vsel %vm66, %v52, 0
    %70 = vmatprep.subr.bf16.mxu0 0
    %71 = vmatpush1.bf16.msra.mxu0 %v57
    %72 = vmatprep.subr.bf16.mxu0 0
    %73 = vmatpush1.bf16.msra.mxu0 %v58
    %74 = vmatprep.subr.bf16.mxu0 0
    %75 = vmatpush1.bf16.msra.mxu0 0
    %76 = vmatprep.subr.bf16.mxu0 0
    %77 = vmatpush1.bf16.msra.mxu0 0
    %78 = vmatprep.subr.bf16.mxu0 0
    %79 = vmatpush1.bf16.msra.mxu0 0
    %80 = vmatprep.subr.bf16.mxu0 0
    %81 = vmatpush1.bf16.msra.mxu0 0
    %82 = vmatprep.subr.bf16.mxu0 0
    %83 = vmatpush1.bf16.msra.mxu0 0
    %84 = vmatprep.subr.bf16.mxu0 0
    %85 = vmatpush1.bf16.msra.mxu0 0
    %86 = vmatprep.subr.bf16.mxu0 0
    %87 = vmatpush1.bf16.msra.mxu0 0
    %88 = vmatprep.subr.bf16.mxu0 0
    %89 = vmatpush1.bf16.msra.mxu0 0
    %90 = vmatprep.subr.bf16.mxu0 0
    %91 = vmatpush1.bf16.msra.mxu0 0
    %92 = vmatprep.subr.bf16.mxu0 0
    %93 = vmatpush1.bf16.msra.mxu0 0
    %94 = vmatprep.subr.bf16.mxu0 0
    %95 = vmatpush1.bf16.msra.mxu0 0
    %96 = vmatprep.subr.bf16.mxu0 0
    %97 = vmatpush1.bf16.msra.mxu0 0
    %98 = vmatprep.subr.bf16.mxu0 0
    %99 = vmatpush1.bf16.msra.mxu0 0
    %100 = vmatprep.subr.bf16.mxu0 0
    %101 = vmatpush1.bf16.msra.mxu0 0
    %102 = vmatprep.mubr.bf16.mxu0 0
    %103 = vmatmul.mubr.bf16.gmra.mrb[0].mxu0 %v68
    %v104 = vpop.f32.mrb[0].mxu0
    %v105 = vadd.f32 %v64, %v104
    %v106 = vpop.f32.mrb[0].mxu0
    %v107 = vpop.f32.mrb[0].mxu0
    %v108 = vpop.f32.mrb[0].mxu0
    %109 = vdwg.mxu0
    %v110 = vmax.f32 %v105, 0.0
    %v111 = vld [vmem:[%s5] sm:$0xff]
    %vm112 = vcmp.ge.u32.totalorder %v111, 1073741824
    %v113 = vmul.f32 %v110, 1.3333334
    %v114 = vsel %vm112, %v113, 0.0
    %v115 = vrot.slane %v114, 4
    %v116 = vadd.f32 %v114, %v115
    %v117 = vrot.slane %v116, 2
    %v118 = vadd.f32 %v116, %v117
    %v119 = vrot.slane %v118, 1
    %v120 = vadd.f32 %v118, %v119
    %v121 = vrcp.pop 8.0
    %v122 = vmul.f32 %v120, %v121
    %v123 = vsub.f32 %v114, %v122
    %v124 = vmul.f32 %v123, %v123
    %v125 = vrot.slane %v124, 4
    %v126 = vadd.f32 %v124, %v125
    %v127 = vrot.slane %v126, 2
    %v128 = vadd.f32 %v126, %v127
    %v129 = vrot.slane %v128, 1
    %v130 = vadd.f32 %v128, %v129
    %v131 = vmul.f32 %v130, %v121
    %v132 = vld [vmem:[%s3] sm:$0x1]
    %v133 = vadd.f32 %v131, 1e-05
    %v134 = vrsqrt.pop %v133
    %v135 = vmul.f32 %v132, %v134
    %v137 = vlaneseq
    %v138 = vshrl.u32 %v137, 7
    %v139 = vsub.s32 0, %v138
    %v140 = vrot.slane %v135, %v139
    %v142 = vmul.f32 %v123, %v140
    %v143 = vld [vmem:[%s4] sm:$0x1]
    %v145 = vlaneseq
    %v146 = vshrl.u32 %v145, 7
    %v147 = vsub.s32 0, %v146
    %v148 = vrot.slane %v143, %v147
    %v150 = vadd.f32 %v142, %v148
    %151 = vst [vmem:[#allocation7] sm:$0xff] %v150
    // Predicated region
    $region34: #{tpu_custom_call.1} parent=1 // pred_check
      _
    $region35: #{tpu_custom_call.1} parent=1 // pred_check_branch
      %153 = sbr.rel (0) target = $region37
    $region36: #{tpu_custom_call.1} parent=1 // pred_region
      %s155 = ssub.s32 128, 128
      %156 = vsyncadd [#allocation4], %s155
      %s158 = sshll.u32 [#allocation7], 4
      %s159 = int_to_ptr.vmem [resolvable:$true] %s158
      %161 = dma.vmem_to_hbm [thread:$0]  %s159, 128, %s6, [#allocation4]
    $region37: #{tpu_custom_call.1} parent=1 // pred_fallthru
      _
    // Predicated region
    $region38: #{tpu_custom_call.1} parent=1 // pred_check
      _
    $region39: #{tpu_custom_call.1} parent=1 // pred_check_branch
      %163 = sbr.rel (0) target = $region41
    $region40: #{tpu_custom_call.1} parent=1 // pred_region
      %164 = dma.done [#allocation4], 128
    $region41: #{tpu_custom_call.1} parent=1 // pred_fallthru
      _
    %165 = vsyncpa [#allocation3], 1
    %166 = vsyncpa [#allocation6], 1
    %167 = vsyncpa [#allocation4], 1

</llo_original>
